<compile_context>
chip_gen: v7x
topology: tpu7x:2x2x1
jax: 0.10.0
libtpu: 0.0.40
codegen_flags: <defaults>
</compile_context>

<pallas_src>
import functools

import jax
import jax.numpy as jnp
import numpy as np
from jax import lax
from jax.experimental import pallas as pl
from jax.experimental.pallas import tpu as pltpu


def _bd_loss_kernel(counts0_ref, betti0_ref, counts1_ref, betti1_ref,   # SMEM 1-D prefetch
                    coords_ref,                                          # VMEM (1,1,4*N2,2) int32
                    pred_ref,                                            # VMEM (1,1,H,W)
                    out_ref,                                             # VMEM (1,1,8,128) f32
                    *, beta, N2, C):
    b = pl.program_id(0)
    c = pl.program_id(1)
    idx = b * C + c

    pred = pred_ref[0, 0]                        # (H, W), input dtype (f32 or bf16)
    H, W = pred.shape
    M = 4 * N2                                   # set0 births | set0 deaths | set1 births | set1 deaths

    coords = coords_ref[0, 0]                    # (4*N2, 2) int32: [:,0]=row, [:,1]=col
    rows = coords[:, 0:1]                        # (4*N2, 1)
    cols = coords[:, 1:2]                        # (4*N2, 1)

    # Batched gather through the MXU: one-hot row selector -> (4*N2, W) rows,
    # then a single lane-masked cross-lane reduce picks the columns.
    # No dynamic indexing: out-of-range coords simply select nothing.
    onehot = (rows == lax.broadcasted_iota(jnp.int32, (M, H), 1)).astype(pred.dtype)
    gathered = jnp.dot(onehot, pred, preferred_element_type=jnp.float32)    # (4*N2, W) f32

    lane_mask = cols == lax.broadcasted_iota(jnp.int32, (M, W), 1)
    vals = jnp.sum(jnp.where(lane_mask, gathered, 0.0), axis=1, keepdims=True)  # (4*N2, 1)

    birth0 = vals[0:N2]
    death0 = vals[N2:2 * N2]
    birth1 = vals[2 * N2:3 * N2]
    death1 = vals[3 * N2:4 * N2]

    n_iota = lax.broadcasted_iota(jnp.int32, (N2, 1), 0)

    def set_loss(birth, death, cnt, bet):
        diff = birth - death
        diff = diff * diff
        ng = jnp.minimum(cnt, bet)
        contrib = jnp.where(n_iota < ng, beta * (1.0 - diff), (1.0 - beta) * diff)
        return jnp.sum(jnp.where(n_iota < cnt, contrib, 0.0))

    loss0 = set_loss(birth0, death0, counts0_ref[idx], betti0_ref[idx])
    loss1 = set_loss(birth1, death1, counts1_ref[idx], betti1_ref[idx])

    # Full (8, 128) tile -> one unmasked store; row 0 carries loss0, row 1 loss1.
    row_io = lax.broadcasted_iota(jnp.int32, (8, 128), 0)
    out_ref[0, 0] = jnp.where(row_io == 0, loss0,
                              jnp.where(row_io == 1, loss1, 0.0))


def birth_death_loss(prediction, intervals0, counts0, betti0,
                     intervals1, counts1, betti1,
                     *, alpha=0.5, beta=0.5):
    """prediction: (B, C, H, W); intervals*: (B, C, N, 2, 2) int32 (padded);
    counts*/betti*: (B, C) int32. Returns (total_loss, loss_0, loss_1)."""
    B, C, H, W = prediction.shape
    N = intervals0.shape[2]
    assert intervals1.shape[2] == N
    N2 = max(8, -(-N // 8) * 8)          # pad interval count to a sublane multiple
    pad = N2 - N

    def split_coords(iv):
        iv = iv.astype(jnp.int32)
        if pad:
            iv = jnp.pad(iv, ((0, 0), (0, 0), (0, pad), (0, 0), (0, 0)))
        # birth (B, C, N2, 2) and death (B, C, N2, 2), last dim = [row, col]
        return iv[:, :, :, 0, :], iv[:, :, :, 1, :]

    b0, d0 = split_coords(intervals0)
    b1, d1 = split_coords(intervals1)
    coords = jnp.concatenate([b0, d0, b1, d1], axis=2)      # (B, C, 4*N2, 2)

    # 1-D SMEM scalar tables (2-D SMEM would pad the lane axis to 128 words).
    c0 = counts0.astype(jnp.int32).reshape(-1)
    t0 = betti0.astype(jnp.int32).reshape(-1)
    c1 = counts1.astype(jnp.int32).reshape(-1)
    t1 = betti1.astype(jnp.int32).reshape(-1)

    kernel = functools.partial(_bd_loss_kernel, beta=float(beta), N2=N2, C=C)

    itemsize = jnp.dtype(prediction.dtype).itemsize
    pred_block = H * W * itemsize
    coords_block = 4 * N2 * 128 * 4          # lane-padded VMEM footprint
    out_block = 8 * 128 * 4
    vmem_needed = 2 * (pred_block + coords_block + out_block) + (4 << 20)
    vmem_limit = int(min(max(vmem_needed, 8 << 20), 64 << 20))

    cost = pl.CostEstimate(
        flops=int(B * C * (2 * 4 * N2 * H * W + 8 * 4 * N2 * W)),
        transcendentals=0,
        bytes_accessed=int(prediction.size * itemsize + coords.size * 4
                           + 4 * B * C * 4 + B * C * 8 * 128 * 4),
    )

    out = pl.pallas_call(
        kernel,
        out_shape=jax.ShapeDtypeStruct((B, C, 8, 128), jnp.float32),
        grid_spec=pltpu.PrefetchScalarGridSpec(
            num_scalar_prefetch=4,
            grid=(B, C),
            in_specs=[
                pl.BlockSpec((1, 1, 4 * N2, 2), lambda b, c, *_: (b, c, 0, 0)),
                pl.BlockSpec((1, 1, H, W), lambda b, c, *_: (b, c, 0, 0)),
            ],
            out_specs=pl.BlockSpec((1, 1, 8, 128), lambda b, c, *_: (b, c, 0, 0)),
        ),
        compiler_params=pltpu.CompilerParams(
            dimension_semantics=("parallel", "parallel"),
            vmem_limit_bytes=vmem_limit),
        cost_estimate=cost,
    )(c0, t0, c1, t1, coords, prediction)

    per_bc_0 = out[:, :, 0, 0]                 # (B, C)
    per_bc_1 = out[:, :, 1, 0]                 # (B, C)
    # mean over classes then mean over batch == overall mean (equal sizes).
    loss_0 = jnp.mean(per_bc_0)
    loss_1 = jnp.mean(per_bc_1)
    total = alpha * loss_0 + (1.0 - alpha) * loss_1
    return total, loss_0, loss_1


def _reference(pred, iv, cnt, bt, beta):
    """NumPy re-implementation of _compute_interval_diff (padded form)."""
    pred = np.asarray(pred, dtype=np.float64)
    iv = np.asarray(iv)
    B, C = pred.shape[:2]
    total = 0.0
    for b in range(B):
        sample_loss = 0.0
        for c in range(C):
            n = int(cnt[b, c])
            if n > 0:
                ivbc = iv[b, c, :n]
                birth = pred[b, c, ivbc[:, 0, 0], ivbc[:, 0, 1]]
                death = pred[b, c, ivbc[:, 1, 0], ivbc[:, 1, 1]]
                diff = (birth - death) ** 2
                comps = int(bt[b, c])
                ng = min(n, comps)
                nb = max(n - comps, 0)
                l = beta * (1.0 - diff[:ng]).sum() if ng > 0 else 0.0
                l += (1.0 - beta) * diff[ng:].sum() if nb > 0 else 0.0
                sample_loss += l
        total += sample_loss / C
    return total / B


if __name__ == "__main__":
    B, C, H, W = 2, 4, 16, 16
    N_MAX = 8
    alpha, beta = 0.4, 0.7

    key = jax.random.PRNGKey(0)
    k1, k2, k3, k4, k5, k6, k7 = jax.random.split(key, 7)

    prediction = jax.nn.sigmoid(jax.random.normal(k1, (B, C, H, W), jnp.float32))

    intervals0 = jax.random.randint(k2, (B, C, N_MAX, 2, 2), 0, H, dtype=jnp.int32)
    intervals1 = jax.random.randint(k3, (B, C, N_MAX, 2, 2), 0, H, dtype=jnp.int32)
    counts0 = jax.random.randint(k4, (B, C), 0, N_MAX + 1, dtype=jnp.int32)
    counts1 = jax.random.randint(k5, (B, C), 0, N_MAX + 1, dtype=jnp.int32)
    betti0 = jax.random.randint(k6, (B, C), 0, 5, dtype=jnp.int32)
    betti1 = jax.random.randint(k7, (B, C), 0, 5, dtype=jnp.int32)
    counts0 = counts0.at[0, 0].set(0)   # exercise the "no intervals" class path

    total, loss_0, loss_1 = birth_death_loss(
        prediction, intervals0, counts0, betti0,
        intervals1, counts1, betti1, alpha=alpha, beta=beta)
    total = jax.block_until_ready(total)

    # Verify against a pure-NumPy reference of the PyTorch semantics.
    ref0 = _reference(prediction, intervals0, np.asarray(counts0), np.asarray(betti0), beta)
    ref1 = _reference(prediction, intervals1, np.asarray(counts1), np.asarray(betti1), beta)
    ref_total = alpha * ref0 + (1.0 - alpha) * ref1
    np.testing.assert_allclose(float(loss_0), ref0, rtol=1e-5, atol=1e-5)
    np.testing.assert_allclose(float(loss_1), ref1, rtol=1e-5, atol=1e-5)
    np.testing.assert_allclose(float(total), ref_total, rtol=1e-5, atol=1e-5)

    print("KERNEL_OK")
</pallas_src>

<mosaic_0001>
module attributes {stable_mosaic.version = 11 : i64} {
  func.func @_bd_loss_kernel(%arg0: i32, %arg1: i32, %arg2: memref<8xi32, #tpu.memory_space<smem>>, %arg3: memref<8xi32, #tpu.memory_space<smem>>, %arg4: memref<8xi32, #tpu.memory_space<smem>>, %arg5: memref<8xi32, #tpu.memory_space<smem>>, %arg6: memref<1x1x32x2xi32, #tpu.memory_space<vmem>>, %arg7: memref<1x1x16x16xf32, #tpu.memory_space<vmem>>, %arg8: memref<1x1x8x128xf32, #tpu.memory_space<vmem>>) attributes {dimension_semantics = [#tpu.dimension_semantics<parallel>, #tpu.dimension_semantics<parallel>], iteration_bounds = array<i64: 2, 4>, scalar_prefetch = 4 : i64, scratch_operands = 0 : i64, tpu.core_type = #tpu.core_type<tc>, window_params = [{transform_indices = @transform_0, window_bounds = array<i64: 1, 1, 32, 2>}, {transform_indices = @transform_1, window_bounds = array<i64: 1, 1, 16, 16>}, {transform_indices = @transform_2, window_bounds = array<i64: 1, 1, 8, 128>}]} {
    %c4_i32 = arith.constant 4 : i32
    %0 = arith.muli %arg0, %c4_i32 : i32
    %1 = arith.addi %0, %arg1 : i32
    %c0 = arith.constant 0 : index
    %c0_0 = arith.constant 0 : index
    %c0_1 = arith.constant 0 : index
    %c0_2 = arith.constant 0 : index
    %2 = vector.load %arg7[%c0, %c0_0, %c0_1, %c0_2] : memref<1x1x16x16xf32, #tpu.memory_space<vmem>>, vector<1x1x16x16xf32>
    %3 = vector.shape_cast %2 : vector<1x1x16x16xf32> to vector<16x16xf32>
    %c0_3 = arith.constant 0 : index
    %c0_4 = arith.constant 0 : index
    %c0_5 = arith.constant 0 : index
    %c0_6 = arith.constant 0 : index
    %4 = vector.load %arg6[%c0_3, %c0_4, %c0_5, %c0_6] : memref<1x1x32x2xi32, #tpu.memory_space<vmem>>, vector<1x1x32x2xi32>
    %5 = vector.shape_cast %4 : vector<1x1x32x2xi32> to vector<32x2xi32>
    %6 = vector.extract_strided_slice %5 {offsets = [0, 0], sizes = [32, 1], strides = [1, 1]} : vector<32x2xi32> to vector<32x1xi32>
    %7 = vector.extract_strided_slice %5 {offsets = [0, 1], sizes = [32, 1], strides = [1, 1]} : vector<32x2xi32> to vector<32x1xi32>
    %8 = tpu.iota {dimensions = array<i32: 1>} : vector<32x16xi32>
    %9 = vector.broadcast %6 : vector<32x1xi32> to vector<32x16xi32>
    %10 = arith.cmpi eq, %9, %8 : vector<32x16xi32>
    %11 = arith.extui %10 : vector<32x16xi1> to vector<32x16xi32>
    %12 = arith.sitofp %11 : vector<32x16xi32> to vector<32x16xf32>
    %cst = arith.constant dense<0.000000e+00> : vector<32x16xf32>
    %13 = tpu.matmul %12, %3, %cst {dimension_numbers = #tpu.dot_dimension_numbers<[1], [0], [0], [1], [0, 0, 1, 1], [], []>} : vector<32x16xf32>, vector<16x16xf32>, vector<32x16xf32> -> vector<32x16xf32>
    %14 = tpu.iota {dimensions = array<i32: 1>} : vector<32x16xi32>
    %15 = vector.broadcast %7 : vector<32x1xi32> to vector<32x16xi32>
    %16 = arith.cmpi eq, %15, %14 : vector<32x16xi32>
    %cst_7 = arith.constant 0.000000e+00 : f32
    %17 = vector.broadcast %cst_7 : f32 to vector<32x16xf32>
    %18 = arith.select %16, %13, %17 : vector<32x16xi1>, vector<32x16xf32>
    %cst_8 = arith.constant dense<0.000000e+00> : vector<32xf32>
    %19 = vector.multi_reduction <add>, %18, %cst_8 [1] : vector<32x16xf32> to vector<32xf32>
    %20 = vector.shape_cast %19 : vector<32xf32> to vector<32x1xf32>
    %21 = vector.extract_strided_slice %20 {offsets = [0, 0], sizes = [8, 1], strides = [1, 1]} : vector<32x1xf32> to vector<8x1xf32>
    %22 = vector.extract_strided_slice %20 {offsets = [8, 0], sizes = [8, 1], strides = [1, 1]} : vector<32x1xf32> to vector<8x1xf32>
    %23 = vector.extract_strided_slice %20 {offsets = [16, 0], sizes = [8, 1], strides = [1, 1]} : vector<32x1xf32> to vector<8x1xf32>
    %24 = vector.extract_strided_slice %20 {offsets = [24, 0], sizes = [8, 1], strides = [1, 1]} : vector<32x1xf32> to vector<8x1xf32>
    %25 = tpu.iota {dimensions = array<i32: 0>} : vector<8x1xi32>
    %26 = arith.index_cast %1 : i32 to index
    %27 = memref.load %arg2[%26] : memref<8xi32, #tpu.memory_space<smem>>
    %28 = arith.index_cast %1 : i32 to index
    %29 = memref.load %arg3[%28] : memref<8xi32, #tpu.memory_space<smem>>
    %30 = arith.subf %21, %22 : vector<8x1xf32>
    %31 = arith.mulf %30, %30 : vector<8x1xf32>
    %32 = arith.minsi %27, %29 : i32
    %33 = vector.broadcast %32 : i32 to vector<8x1xi32>
    %34 = arith.cmpi slt, %25, %33 : vector<8x1xi32>
    %cst_9 = arith.constant 1.000000e+00 : f32
    %35 = vector.broadcast %cst_9 : f32 to vector<8x1xf32>
    %36 = arith.subf %35, %31 : vector<8x1xf32>
    %cst_10 = arith.constant 0.699999988 : f32
    %37 = vector.broadcast %cst_10 : f32 to vector<8x1xf32>
    %38 = arith.mulf %37, %36 : vector<8x1xf32>
    %cst_11 = arith.constant 3.000000e-01 : f32
    %39 = vector.broadcast %cst_11 : f32 to vector<8x1xf32>
    %40 = arith.mulf %39, %31 : vector<8x1xf32>
    %41 = arith.select %34, %38, %40 : vector<8x1xi1>, vector<8x1xf32>
    %42 = vector.broadcast %27 : i32 to vector<8x1xi32>
    %43 = arith.cmpi slt, %25, %42 : vector<8x1xi32>
    %cst_12 = arith.constant 0.000000e+00 : f32
    %44 = vector.broadcast %cst_12 : f32 to vector<8x1xf32>
    %45 = arith.select %43, %41, %44 : vector<8x1xi1>, vector<8x1xf32>
    %46 = vector.shape_cast %45 : vector<8x1xf32> to vector<1x8x1xf32>
    %cst_13 = arith.constant dense<0.000000e+00> : vector<1xf32>
    %47 = vector.multi_reduction <add>, %46, %cst_13 [1, 2] : vector<1x8x1xf32> to vector<1xf32>
    %48 = vector.shape_cast %47 : vector<1xf32> to vector<1x1x1xf32>
    %49 = vector.extract %48[0, 0, 0] : f32 from vector<1x1x1xf32>
    %50 = arith.index_cast %1 : i32 to index
    %51 = memref.load %arg4[%50] : memref<8xi32, #tpu.memory_space<smem>>
    %52 = arith.index_cast %1 : i32 to index
    %53 = memref.load %arg5[%52] : memref<8xi32, #tpu.memory_space<smem>>
    %54 = arith.subf %23, %24 : vector<8x1xf32>
    %55 = arith.mulf %54, %54 : vector<8x1xf32>
    %56 = arith.minsi %51, %53 : i32
    %57 = vector.broadcast %56 : i32 to vector<8x1xi32>
    %58 = arith.cmpi slt, %25, %57 : vector<8x1xi32>
    %cst_14 = arith.constant 1.000000e+00 : f32
    %59 = vector.broadcast %cst_14 : f32 to vector<8x1xf32>
    %60 = arith.subf %59, %55 : vector<8x1xf32>
    %cst_15 = arith.constant 0.699999988 : f32
    %61 = vector.broadcast %cst_15 : f32 to vector<8x1xf32>
    %62 = arith.mulf %61, %60 : vector<8x1xf32>
    %cst_16 = arith.constant 3.000000e-01 : f32
    %63 = vector.broadcast %cst_16 : f32 to vector<8x1xf32>
    %64 = arith.mulf %63, %55 : vector<8x1xf32>
    %65 = arith.select %58, %62, %64 : vector<8x1xi1>, vector<8x1xf32>
    %66 = vector.broadcast %51 : i32 to vector<8x1xi32>
    %67 = arith.cmpi slt, %25, %66 : vector<8x1xi32>
    %cst_17 = arith.constant 0.000000e+00 : f32
    %68 = vector.broadcast %cst_17 : f32 to vector<8x1xf32>
    %69 = arith.select %67, %65, %68 : vector<8x1xi1>, vector<8x1xf32>
    %70 = vector.shape_cast %69 : vector<8x1xf32> to vector<1x8x1xf32>
    %cst_18 = arith.constant dense<0.000000e+00> : vector<1xf32>
    %71 = vector.multi_reduction <add>, %70, %cst_18 [1, 2] : vector<1x8x1xf32> to vector<1xf32>
    %72 = vector.shape_cast %71 : vector<1xf32> to vector<1x1x1xf32>
    %73 = vector.extract %72[0, 0, 0] : f32 from vector<1x1x1xf32>
    %74 = tpu.iota {dimensions = array<i32: 0>} : vector<8x128xi32>
    %c0_i32 = arith.constant 0 : i32
    %75 = vector.broadcast %c0_i32 : i32 to vector<8x128xi32>
    %76 = arith.cmpi eq, %74, %75 : vector<8x128xi32>
    %c1_i32 = arith.constant 1 : i32
    %77 = vector.broadcast %c1_i32 : i32 to vector<8x128xi32>
    %78 = arith.cmpi eq, %74, %77 : vector<8x128xi32>
    %cst_19 = arith.constant 0.000000e+00 : f32
    %79 = vector.broadcast %73 : f32 to vector<8x128xf32>
    %80 = vector.broadcast %cst_19 : f32 to vector<8x128xf32>
    %81 = arith.select %78, %79, %80 : vector<8x128xi1>, vector<8x128xf32>
    %82 = vector.broadcast %49 : f32 to vector<8x128xf32>
    %83 = arith.select %76, %82, %81 : vector<8x128xi1>, vector<8x128xf32>
    %c0_20 = arith.constant 0 : index
    %c0_21 = arith.constant 0 : index
    %c0_22 = arith.constant 0 : index
    %c0_23 = arith.constant 0 : index
    %84 = vector.load %arg8[%c0_20, %c0_21, %c0_22, %c0_23] : memref<1x1x8x128xf32, #tpu.memory_space<vmem>>, vector<1x1x8x128xf32>
    %85 = vector.shape_cast %84 : vector<1x1x8x128xf32> to vector<8x128xf32>
    %86 = vector.shape_cast %83 : vector<8x128xf32> to vector<1x1x8x128xf32>
    tpu.vector_store %arg8[%c0_20, %c0_21, %c0_22, %c0_23], %86 {strides = array<i32>} : memref<1x1x8x128xf32, #tpu.memory_space<vmem>>, vector<1x1x8x128xf32>,
    return
  }
  func.func @transform_0(%arg0: i32, %arg1: i32, %arg2: memref<8xi32, #tpu.memory_space<smem>>, %arg3: memref<8xi32, #tpu.memory_space<smem>>, %arg4: memref<8xi32, #tpu.memory_space<smem>>, %arg5: memref<8xi32, #tpu.memory_space<smem>>) -> (i32, i32, i32, i32) {
    %c0_i32 = arith.constant 0 : i32
    %c0_i32_0 = arith.constant 0 : i32
    %c0_i32_1 = arith.constant 0 : i32
    return %arg0, %arg1, %c0_i32, %c0_i32_0 : i32, i32, i32, i32
  }
  func.func @transform_1(%arg0: i32, %arg1: i32, %arg2: memref<8xi32, #tpu.memory_space<smem>>, %arg3: memref<8xi32, #tpu.memory_space<smem>>, %arg4: memref<8xi32, #tpu.memory_space<smem>>, %arg5: memref<8xi32, #tpu.memory_space<smem>>) -> (i32, i32, i32, i32) {
    %c0_i32 = arith.constant 0 : i32
    %c0_i32_0 = arith.constant 0 : i32
    %c0_i32_1 = arith.constant 0 : i32
    return %arg0, %arg1, %c0_i32, %c0_i32_0 : i32, i32, i32, i32
  }
  func.func @transform_2(%arg0: i32, %arg1: i32, %arg2: memref<8xi32, #tpu.memory_space<smem>>, %arg3: memref<8xi32, #tpu.memory_space<smem>>, %arg4: memref<8xi32, #tpu.memory_space<smem>>, %arg5: memref<8xi32, #tpu.memory_space<smem>>) -> (i32, i32, i32, i32) {
    %c0_i32 = arith.constant 0 : i32
    %c0_i32_0 = arith.constant 0 : i32
    %c0_i32_1 = arith.constant 0 : i32
    return %arg0, %arg1, %c0_i32, %c0_i32_0 : i32, i32, i32, i32
  }
}

</mosaic_0001>

<llo_original>
// kernel: tpu_custom_call.1
$region0: #{tpu_custom_call.1}
  #allocation0 [shape = 'u32[]', space=smem, size = 0x4, offset = 0x4, fixed_abs, tag = 'smem constant byte address 0x4 - core index']
  #allocation1 [shape = 'u32[144,128]{1,0:T(1,128)}', space=vmem, size = 0x12000, scoped, tag = 'internal scratch']
  #allocation2 [shape = 's32[1]{0}', space=sflag, size = 0x4, scoped, tag = 'scoped memory for tpu_custom_call.1']
  #allocation3 [shape = 'u8[512]{0}', space=smem, size = 0x200, scoped, tag = 'prefetched SMEM operand 0']
  #allocation4 [shape = 'u8[512]{0}', space=smem, size = 0x200, scoped, tag = 'prefetched SMEM operand 1']
  #allocation5 [shape = 'u8[512]{0}', space=smem, size = 0x200, scoped, tag = 'prefetched SMEM operand 2']
  #allocation6 [shape = 'u8[512]{0}', space=smem, size = 0x200, scoped, tag = 'prefetched SMEM operand 3']
  %s0 = inlined_call_operand.vmem [shape: s32[8], index: 0, kind: input, shape index: {}]
  %s1 = inlined_call_operand.vmem [shape: s32[8], index: 1, kind: input, shape index: {}]
  %s2 = inlined_call_operand.vmem [shape: s32[8], index: 2, kind: input, shape index: {}]
  %s3 = inlined_call_operand.vmem [shape: s32[8], index: 3, kind: input, shape index: {}]
  %s4 = inlined_call_operand.vmem [shape: s32[2,4,32,2], index: 4, kind: input, shape index: {}]
  %s5 = inlined_call_operand.vmem [shape: f32[2,4,16,16], index: 5, kind: input, shape index: {}]
  %s6 = inlined_call_operand.hbm [shape: f32[2,4,8,128], index: 6, kind: output, shape index: {}]
  %s7 = sld [smem:[#allocation0]]
  $region41: #{tpu_custom_call.1} parent=0
    _
  %s9 = ssub.s32 1, %s7
  %s10 = scalar_select 0, %s9, %s7
  %s11 = sshll.u32 %s0, 4
  %s12 = int_to_ptr.vmem [resolvable:$true] %s11
  %14 = dma.vmem_to_smem %s12, 16, [#allocation3], [#allocation2]
  %s15 = sshll.u32 %s1, 4
  %s16 = int_to_ptr.vmem [resolvable:$true] %s15
  %18 = dma.vmem_to_smem %s16, 16, [#allocation4], [#allocation2]
  %s19 = sshll.u32 %s2, 4
  %s20 = int_to_ptr.vmem [resolvable:$true] %s19
  %22 = dma.vmem_to_smem %s20, 16, [#allocation5], [#allocation2]
  %s23 = sshll.u32 %s3, 4
  %s24 = int_to_ptr.vmem [resolvable:$true] %s23
  %26 = dma.vmem_to_smem %s24, 16, [#allocation6], [#allocation2]
  %27 = dma.done [#allocation2], 64
  %28 = sfence
  $region1: #{tpu_custom_call.1} parent=0
    #allocation7 [shape = 'u8[8192]{0}', space=vmem, size = 0x2000, scoped, tag = 'output window, operand 0']
    #allocation8 [shape = 's32[2]{0}', space=sflag, size = 0x8, scoped, tag = 'scoped memory for tpu_custom_call.1']
    %29 = vsyncpa [#allocation8], 0
    %s30 = scalar_lea.sflag [#allocation8], 1
    %31 = vsyncpa %s30, 0
    loop: start=0, step=1, limit=10
    $region2: #{tpu_custom_call.1} parent=1 // loop_pre_header
      _
    $region3: #{tpu_custom_call.1} parent=1 // loop_header
      %s33 = sphi 0, %s37
      %p34 = scmp.ge.s32.totalorder %s33, 10
      %s40 = sphi 0, %s52
      %s41 = sphi 0, %s48
      %s42 = sphi 0, %s40
      %s43 = sphi 0, %s41
      %s44 = sphi 0, %s42
      %s45 = sphi 0, %s43
      %s57 = sphi 0, %s59
      %s60 = sphi 0, %s57
      %s61 = sphi 0, %s60
      %s77 = sphi 0, %s61
      %s85 = sphi 0, %s87
      %s88 = sphi 0, %s85
      %s89 = sphi 0, %s88
      %s105 = sphi 0, %s89
      %s113 = sphi 0, %s115
      %s116 = sphi 0, %s113
      %s117 = sphi 0, %s116
      %s133 = sphi 0, %s117
    $region4: #{tpu_custom_call.1} parent=1 // loop_header_branch
      %36 = sbr.rel (%p34) target = $region8
    $region5: #{tpu_custom_call.1} parent=1 // loop_body
      %s38 = ssub.s32 %s33, 1
      %s39 = ssub.s32 %s33, 2
      %s46 = sadd.s32 1, %s41
      %p47 = scmp.ge.s32.totalorder %s46, 4
      %s48 = scalar_select %p47, 0, %s46
      %s49 = sadd.s32 1, %s40
      %s50 = scalar_select %p47, %s49, %s40
      %p51 = scmp.ge.s32.totalorder %s50, 2
      %s52 = scalar_select %p51, 0, %s50
      %s53 = ssub.s32 %s40, %s52
      %s54 = ssub.s32 %s41, %s48
      %s55 = sor.u32 %s53, %s54
      %p56 = scmp.eq.s32.totalorder %s55, 0
      %s58 = sadd.s32 %s57, 1
      %s59 = scalar_select %p56, %s57, %s58
      %p62 = pneg %p56
      %p63 = scmp.eq.s32.totalorder %s33, 7
      %p64 = por %p62, %p63
      %p65 = scmp.ne.s32.totalorder %s57, %s60
      %p66 = scmp.eq.s32.totalorder %s33, 0
      %p67 = por %p65, %p66
      %p68 = scmp.ne.s32.totalorder %s57, %s60
      %p69 = scmp.eq.s32.totalorder %s38, 7
      %p70 = por %p68, %p69
      %p71 = scmp.ne.s32.totalorder %s60, %s61
      %p72 = scmp.eq.s32.totalorder %s38, 0
      %p73 = por %p71, %p72
      %p74 = scmp.ne.s32.totalorder %s60, %s61
      %p75 = scmp.eq.s32.totalorder %s39, 7
      %p76 = por %p74, %p75
      %p78 = scmp.ne.s32.totalorder %s61, %s77
      %p79 = scmp.eq.s32.totalorder %s39, 0
      %p80 = por %p78, %p79
      %s81 = ssub.s32 %s40, %s52
      %s82 = ssub.s32 %s41, %s48
      %s83 = sor.u32 %s81, %s82
      %p84 = scmp.eq.s32.totalorder %s83, 0
      %s86 = sadd.s32 %s85, 1
      %s87 = scalar_select %p84, %s85, %s86
      %p90 = pneg %p84
      %p91 = scmp.eq.s32.totalorder %s33, 7
      %p92 = por %p90, %p91
      %p93 = scmp.ne.s32.totalorder %s85, %s88
      %p94 = scmp.eq.s32.totalorder %s33, 0
      %p95 = por %p93, %p94
      %p96 = scmp.ne.s32.totalorder %s85, %s88
      %p97 = scmp.eq.s32.totalorder %s38, 7
      %p98 = por %p96, %p97
      %p99 = scmp.ne.s32.totalorder %s88, %s89
      %p100 = scmp.eq.s32.totalorder %s38, 0
      %p101 = por %p99, %p100
      %p102 = scmp.ne.s32.totalorder %s88, %s89
      %p103 = scmp.eq.s32.totalorder %s39, 7
      %p104 = por %p102, %p103
      %p106 = scmp.ne.s32.totalorder %s89, %s105
      %p107 = scmp.eq.s32.totalorder %s39, 0
      %p108 = por %p106, %p107
      %s109 = ssub.s32 %s40, %s52
      %s110 = ssub.s32 %s41, %s48
      %s111 = sor.u32 %s109, %s110
      %p112 = scmp.eq.s32.totalorder %s111, 0
      %s114 = sadd.s32 %s113, 1
      %s115 = scalar_select %p112, %s113, %s114
      %p118 = pneg %p112
      %p119 = scmp.eq.s32.totalorder %s33, 7
      %p120 = por %p118, %p119
      %p121 = scmp.ne.s32.totalorder %s113, %s116
      %p122 = scmp.eq.s32.totalorder %s33, 0
      %p123 = por %p121, %p122
      %p124 = scmp.ne.s32.totalorder %s113, %s116
      %p125 = scmp.eq.s32.totalorder %s38, 7
      %p126 = por %p124, %p125
      %p127 = scmp.ne.s32.totalorder %s116, %s117
      %p128 = scmp.eq.s32.totalorder %s38, 0
      %p129 = por %p127, %p128
      %p130 = scmp.ne.s32.totalorder %s116, %s117
      %p131 = scmp.eq.s32.totalorder %s39, 7
      %p132 = por %p130, %p131
      %p134 = scmp.ne.s32.totalorder %s117, %s133
      %p135 = scmp.eq.s32.totalorder %s39, 0
      %p136 = por %p134, %p135
      %p137 = scmp.le.s32.totalorder 1, %s33
      %p138 = scmp.lt.s32.totalorder %s33, 9
      %p139 = pnand %p137, %p138
      %p140 = pneg %p139
      // Predicated region
      $region9: #{tpu_custom_call.1} parent=5 // pred_check
        _
      $region10: #{tpu_custom_call.1} parent=5 // pred_check_branch
        %142 = sbr.rel (%p139) target = $region12
      $region11: #{tpu_custom_call.1} parent=5 // pred_region
        %s143 = ssub.s32 %s33, 1
      $region12: #{tpu_custom_call.1} parent=5 // pred_fallthru
        _
      %p144 = scmp.lt.s32.totalorder %s33, 8
      // Predicated region
      $region13: #{tpu_custom_call.1} parent=5 // pred_check
        %p145 = pneg %p144
      $region14: #{tpu_custom_call.1} parent=5 // pred_check_branch
        %147 = sbr.rel (%p145) target = $region16
      $region15: #{tpu_custom_call.1} parent=5 // pred_region
        // Predicated region
        $region17: #{tpu_custom_call.1} parent=15 // pred_check
          %p148 = pneg %p67
        $region18: #{tpu_custom_call.1} parent=15 // pred_check_branch
          %150 = sbr.rel (%p148) target = $region20
        $region19: #{tpu_custom_call.1} parent=15 // pred_region
          %p151 = scmp.lt.s32.totalorder %s40, 1
          %s152 = scalar_select %p151, %s40, 1
          %p153 = scmp.lt.s32.totalorder %s41, 3
          %s154 = scalar_select %p153, %s41, 3
          %s155 = smul.addr %s154, 4
          %s156 = smul.addr %s152, 16
          %s157 = sadd.s32 %s155, %s156
          %s158 = smul.addr %s157, 8
          %s159 = scalar_lea.vmem %s4, %s158
        $region20: #{tpu_custom_call.1} parent=15 // pred_fallthru
          _
        // Predicated region
        $region21: #{tpu_custom_call.1} parent=15 // pred_check
          %p160 = pneg %p95
        $region22: #{tpu_custom_call.1} parent=15 // pred_check_branch
          %162 = sbr.rel (%p160) target = $region24
        $region23: #{tpu_custom_call.1} parent=15 // pred_region
          %p163 = scmp.lt.s32.totalorder %s40, 1
          %s164 = scalar_select %p163, %s40, 1
          %p165 = scmp.lt.s32.totalorder %s41, 3
          %s166 = scalar_select %p165, %s41, 3
          %s167 = smul.addr %s166, 2
          %s168 = smul.addr %s164, 8
          %s169 = sadd.s32 %s167, %s168
          %s170 = smul.addr %s169, 8
          %s171 = scalar_lea.vmem %s5, %s170
        $region24: #{tpu_custom_call.1} parent=15 // pred_fallthru
          _
      $region16: #{tpu_custom_call.1} parent=5 // pred_fallthru
        _
      %p172 = scmp.le.s32.totalorder 1, %s33
      %p173 = scmp.lt.s32.totalorder %s33, 9
      %p174 = pnand %p172, %p173
      %p175 = pneg %p174
      // Predicated region
      $region25: #{tpu_custom_call.1} parent=5 // pred_check
        _
      $region26: #{tpu_custom_call.1} parent=5 // pred_check_branch
        %177 = sbr.rel (%p174) target = $region28
      $region27: #{tpu_custom_call.1} parent=5 // pred_region
        %s178 = ssub.s32 %s33, 1
        %p179 = scmp.lt.s32.totalorder %s42, 1
        %s180 = scalar_select %p179, %s42, 1
        %p181 = scmp.lt.s32.totalorder %s43, 3
        %s182 = scalar_select %p181, %s43, 3
        %s183 = smul.addr %s182, 4
        %s184 = smul.addr %s180, 16
        %s185 = sadd.s32 %s183, %s184
        %s186 = smul.addr %s185, 8
        %s187 = scalar_lea.vmem %s4, %s186
        %p188 = pneg %p73
        %p189 = pneg %p70
        %p190 = scmp.lt.s32.totalorder %s42, 1
        %s191 = scalar_select %p190, %s42, 1
        %p192 = scmp.lt.s32.totalorder %s43, 3
        %s193 = scalar_select %p192, %s43, 3
        %s194 = smul.addr %s193, 2
        %s195 = smul.addr %s191, 8
        %s196 = sadd.s32 %s194, %s195
        %s197 = smul.addr %s196, 8
        %s198 = scalar_lea.vmem %s5, %s197
        %p199 = pneg %p101
        %p200 = pneg %p98
        %p201 = pneg %p129
        %p202 = pneg %p126
        %s203 = sand.u32 %s116, 1
        %s204 = scalar_lea.sflag [#allocation8], %s203
        %s205 = sand.u32 %s116, 1
        %s206 = smul.addr %s205, 8
        %s207 = scalar_lea.vmem [#allocation7], %s206
        %p208 = scmp.lt.s32.totalorder %s42, 1
        %s209 = scalar_select %p208, %s42, 1
        %p210 = scmp.lt.s32.totalorder %s43, 3
        %s211 = scalar_select %p210, %s43, 3
        %s212 = smul.addr %s211, 4
        %s213 = smul.addr %s209, 16
        %s214 = sadd.s32 %s212, %s213
        %s215 = smul.addr %s214, 8
        %s216 = scalar_lea.vmem %s4, %s215
        %p217 = scmp.lt.s32.totalorder %s42, 1
        %s218 = scalar_select %p217, %s42, 1
        %p219 = scmp.lt.s32.totalorder %s43, 3
        %s220 = scalar_select %p219, %s43, 3
        %s221 = smul.addr %s220, 2
        %s222 = smul.addr %s218, 8
        %s223 = sadd.s32 %s221, %s222
        %s224 = smul.addr %s223, 8
        %s225 = scalar_lea.vmem %s5, %s224
        %s226 = smul.u32 %s42, 4
        %s227 = sadd.s32 %s226, %s43
        %v228 = vld [vmem:[%s225] sm:$0xff]
        %v229 = vld [vmem:[%s225 + $0x8] sm:$0xff]
        %v230 = vld [vmem:[%s216] sm:$0xff]
        %v231 = vld [vmem:[%s216 + $0x8] sm:$0xff]
        %v232 = vld [vmem:[%s216 + $0x10] sm:$0xff]
        %v233 = vld [vmem:[%s216 + $0x18] sm:$0xff]
        %v234 = vlaneseq
        %v235 = vand.u32 %v234, 127
        %236 = vset.pattern.permute.xlu0 0
        %237 = vperm.xlu0 %236, %v230
        %v238 = vpop.permute.xlu0 %237
        %239 = vset.pattern.permute.xlu0 0
        %240 = vperm.xlu0 %239, %v231
        %v241 = vpop.permute.xlu0 %240
        %242 = vset.pattern.permute.xlu0 0
        %243 = vperm.xlu0 %242, %v232
        %v244 = vpop.permute.xlu0 %243
        %245 = vset.pattern.permute.xlu0 0
        %246 = vperm.xlu0 %245, %v233
        %v247 = vpop.permute.xlu0 %246
        %vm248 = vcmp.eq.s32.totalorder %v238, %v235
        %vm249 = vcmp.eq.s32.totalorder %v241, %v235
        %vm250 = vcmp.eq.s32.totalorder %v244, %v235
        %vm251 = vcmp.eq.s32.totalorder %v247, %v235
        %v252 = vsel %vm248, 1, 0
        %v253 = vsel %vm249, 1, 0
        %v254 = vsel %vm250, 1, 0
        %v255 = vsel %vm251, 1, 0
        %v256 = vcvt.s32.f32 %v252
        %v257 = vcvt.s32.f32 %v253
        %v258 = vcvt.s32.f32 %v254
        %v259 = vcvt.s32.f32 %v255
        %vm260 = vcmask 130048
        %v262 = vsel %vm260, %v256, 0
        %v265 = vsel %vm260, %v257, 0
        %v268 = vsel %vm260, %v258, 0
        %v271 = vsel %vm260, %v259, 0
        %273 = vmatprep.subr.mxu0 0.0
        %274 = vmatpush1.msra.mxu0 %v228
        %275 = vmatprep.subr.mxu0 0.0
        %276 = vmatpush1.msra.mxu0 %v229
        %277 = vmatprep.subr.mxu0 0.0
        %278 = vmatpush1.msra.mxu0 0.0
        %279 = vmatprep.subr.mxu0 0.0
        %280 = vmatpush1.msra.mxu0 0.0
        %281 = vmatprep.subr.mxu0 0.0
        %282 = vmatpush1.msra.mxu0 0.0
        %283 = vmatprep.subr.mxu0 0.0
        %284 = vmatpush1.msra.mxu0 0.0
        %285 = vmatprep.subr.mxu0 0.0
        %286 = vmatpush1.msra.mxu0 0.0
        %287 = vmatprep.subr.mxu0 0.0
        %288 = vmatpush1.msra.mxu0 0.0
        %289 = vmatprep.subr.mxu0 0.0
        %290 = vmatpush1.msra.mxu0 0.0
        %291 = vmatprep.subr.mxu0 0.0
        %292 = vmatpush1.msra.mxu0 0.0
        %293 = vmatprep.subr.mxu0 0.0
        %294 = vmatpush1.msra.mxu0 0.0
        %295 = vmatprep.subr.mxu0 0.0
        %296 = vmatpush1.msra.mxu0 0.0
        %297 = vmatprep.subr.mxu0 0.0
        %298 = vmatpush1.msra.mxu0 0.0
        %299 = vmatprep.subr.mxu0 0.0
        %300 = vmatpush1.msra.mxu0 0.0
        %301 = vmatprep.subr.mxu0 0.0
        %302 = vmatpush1.msra.mxu0 0.0
        %303 = vmatprep.subr.mxu0 0.0
        %304 = vmatpush1.msra.mxu0 0.0
        %305 = vmatprep.subr.mxu0 0.0
        %306 = vmatpush1.msra.mxu0 0.0
        %307 = vmatprep.subr.mxu0 0.0
        %308 = vmatpush1.msra.mxu0 0.0
        %309 = vmatprep.subr.mxu0 0.0
        %310 = vmatpush1.msra.mxu0 0.0
        %311 = vmatprep.subr.mxu0 0.0
        %312 = vmatpush1.msra.mxu0 0.0
        %313 = vmatprep.subr.mxu0 0.0
        %314 = vmatpush1.msra.mxu0 0.0
        %315 = vmatprep.subr.mxu0 0.0
        %316 = vmatpush1.msra.mxu0 0.0
        %317 = vmatprep.subr.mxu0 0.0
        %318 = vmatpush1.msra.mxu0 0.0
        %319 = vmatprep.subr.mxu0 0.0
        %320 = vmatpush1.msra.mxu0 0.0
        %321 = vmatprep.subr.mxu0 0.0
        %322 = vmatpush1.msra.mxu0 0.0
        %323 = vmatprep.subr.mxu0 0.0
        %324 = vmatpush1.msra.mxu0 0.0
        %325 = vmatprep.subr.mxu0 0.0
        %326 = vmatpush1.msra.mxu0 0.0
        %327 = vmatprep.subr.mxu0 0.0
        %328 = vmatpush1.msra.mxu0 0.0
        %329 = vmatprep.subr.mxu0 0.0
        %330 = vmatpush1.msra.mxu0 0.0
        %331 = vmatprep.subr.mxu0 0.0
        %332 = vmatpush1.msra.mxu0 0.0
        %333 = vmatprep.subr.mxu0 0.0
        %334 = vmatpush1.msra.mxu0 0.0
        %335 = vmatprep.subr.mxu0 0.0
        %336 = vmatpush1.msra.mxu0 0.0
        %337 = vmatprep.mubr.f32.mxu0 0.0
        %338 = vmatmul.mubr.f32.gmra.mrb[0].mxu0 %v262
        %v339 = vpop.f32.mrb[0].mxu0
        %v340 = vadd.f32 0.0, %v339
        %v341 = vpop.f32.mrb[0].mxu0
        %342 = vmatprep.mubr.f32.mxu0 0.0
        %343 = vmatmul.mubr.f32.gmra.mrb[0].mxu0 %v265
        %v344 = vpop.f32.mrb[0].mxu0
        %v345 = vadd.f32 0.0, %v344
        %v346 = vpop.f32.mrb[0].mxu0
        %347 = vmatprep.mubr.f32.mxu0 0.0
        %348 = vmatmul.mubr.f32.gmra.mrb[0].mxu0 %v268
        %v349 = vpop.f32.mrb[0].mxu0
        %v350 = vadd.f32 0.0, %v349
        %v351 = vpop.f32.mrb[0].mxu0
        %352 = vmatprep.mubr.f32.mxu0 0.0
        %353 = vmatmul.mubr.f32.gmra.mrb[0].mxu0 %v271
        %v354 = vpop.f32.mrb[0].mxu0
        %v355 = vadd.f32 0.0, %v354
        %v356 = vpop.f32.mrb[0].mxu0
        %357 = vdwg.mxu0
        %358 = vset.pattern.permute.xlu0 1
        %359 = vperm.xlu0 %358, %v230
        %v360 = vpop.permute.xlu0 %359
        %361 = vset.pattern.permute.xlu0 1
        %362 = vperm.xlu0 %361, %v231
        %v363 = vpop.permute.xlu0 %362
        %364 = vset.pattern.permute.xlu0 1
        %365 = vperm.xlu0 %364, %v232
        %v366 = vpop.permute.xlu0 %365
        %367 = vset.pattern.permute.xlu0 1
        %368 = vperm.xlu0 %367, %v233
        %v369 = vpop.permute.xlu0 %368
        %vm370 = vcmp.eq.s32.totalorder %v360, %v235
        %vm371 = vcmp.eq.s32.totalorder %v363, %v235
        %vm372 = vcmp.eq.s32.totalorder %v366, %v235
        %vm373 = vcmp.eq.s32.totalorder %v369, %v235
        %v374 = vsel %vm370, %v340, 0.0
        %v375 = vsel %vm371, %v345, 0.0
        %v376 = vsel %vm372, %v350, 0.0
        %v377 = vsel %vm373, %v355, 0.0
        %v378 = vsel %vm260, %v374, 0.0
        %379 = vadd.xlane.f32.xlu0 %v378
        %v380 = vpop.xlane.xlu0 %379
        %v381 = vsel %vm260, %v375, 0.0
        %382 = vadd.xlane.f32.xlu0 %v381
        %v383 = vpop.xlane.xlu0 %382
        %v384 = vsel %vm260, %v376, 0.0
        %385 = vadd.xlane.f32.xlu0 %v384
        %v386 = vpop.xlane.xlu0 %385
        %v387 = vsel %vm260, %v377, 0.0
        %388 = vadd.xlane.f32.xlu0 %v387
        %v389 = vpop.xlane.xlu0 %388
        %v390 = vlaneseq
        %v391 = vshrl.u32 %v390, 7
        %s392 = sld [smem:[#allocation3 + %s227]]
        %s393 = sld [smem:[#allocation4 + %s227]]
        %v394 = vsub.f32 %v380, %v383
        %v395 = vmul.f32 %v394, %v394
        %p396 = scmp.lt.s32.totalorder %s392, %s393
        %s397 = scalar_select %p396, %s392, %s393
        %v398 = vstv %s397
        %vm399 = vcmp.lt.s32.totalorder %v391, %v398
        %v400 = vsub.f32 1.0, %v395
        %v401 = vmul.f32 %v400, 0.7
        %v402 = vmul.f32 %v395, 0.3
        %v403 = vsel %vm399, %v401, %v402
        %v404 = vstv %s392
        %vm405 = vcmp.lt.s32.totalorder %v391, %v404
        %v406 = vsel %vm405, %v403, 0.0
        %vm407 = vcmask 7168
        %v408 = vsel %vm407, %v406, 0.0
        %409 = vadd.xlane.f32.xlu0 %v408
        %v410 = vpop.xlane.xlu0 %409
        %v411 = vrot.slane %v410, 4
        %v412 = vadd.f32 %v410, %v411
        %v413 = vrot.slane %v412, 2
        %v414 = vadd.f32 %v412, %v413
        %v415 = vrot.slane %v414, 1
        %v416 = vadd.f32 %v414, %v415
        %s417 = vtos %v416
        %s418 = sld [smem:[#allocation5 + %s227]]
        %s419 = sld [smem:[#allocation6 + %s227]]
        %v420 = vsub.f32 %v386, %v389
        %v421 = vmul.f32 %v420, %v420
        %p422 = scmp.lt.s32.totalorder %s418, %s419
        %s423 = scalar_select %p422, %s418, %s419
        %v424 = vstv %s423
        %vm425 = vcmp.lt.s32.totalorder %v391, %v424
        %v426 = vsub.f32 1.0, %v421
        %v427 = vmul.f32 %v426, 0.7
        %v428 = vmul.f32 %v421, 0.3
        %v429 = vsel %vm425, %v427, %v428
        %v430 = vstv %s418
        %vm431 = vcmp.lt.s32.totalorder %v391, %v430
        %v432 = vsel %vm431, %v429, 0.0
        %v433 = vsel %vm407, %v432, 0.0
        %434 = vadd.xlane.f32.xlu0 %v433
        %v435 = vpop.xlane.xlu0 %434
        %v436 = vrot.slane %v435, 4
        %v437 = vadd.f32 %v435, %v436
        %v438 = vrot.slane %v437, 2
        %v439 = vadd.f32 %v437, %v438
        %v440 = vrot.slane %v439, 1
        %v441 = vadd.f32 %v439, %v440
        %s442 = vtos %v441
        %vm443 = vcmp.eq.s32.totalorder %v391, 0
        %vm444 = vcmp.eq.s32.totalorder %v391, 1
        %v445 = vstv %s442
        %v446 = vsel %vm444, %v445, 0.0
        %v447 = vstv %s417
        %v448 = vsel %vm443, %v447, %v446
        %449 = vst [vmem:[%s207] sm:$0xff] %v448
        %s450 = sand.u32 %s116, 1
        %s451 = scalar_lea.sflag [#allocation8], %s450
        %s452 = sand.u32 %s116, 1
        %s453 = smul.addr %s452, 8
        %s454 = scalar_lea.vmem [#allocation7], %s453
        // Predicated region
        $region29: #{tpu_custom_call.1} parent=27 // pred_check
          %p455 = pneg %p126
        $region30: #{tpu_custom_call.1} parent=27 // pred_check_branch
          %457 = sbr.rel (%p455) target = $region32
        $region31: #{tpu_custom_call.1} parent=27 // pred_region
          %s459 = ssub.s32 128, 128
          %460 = vsyncadd %s451, %s459
          %s461 = smul.addr %s42, 4
          %s462 = sadd.s32 %s43, %s461
          %s463 = smul.addr %s462, 128
          %s464 = scalar_lea.hbm %s6, %s463
          %s466 = sshll.u32 %s454, 4
          %s467 = int_to_ptr.vmem [resolvable:$true] %s466
          %469 = dma.vmem_to_hbm [thread:$0]  %s467, 128, %s464, %s451
        $region32: #{tpu_custom_call.1} parent=27 // pred_fallthru
          _
      $region28: #{tpu_custom_call.1} parent=5 // pred_fallthru
        _
      %p470 = scmp.le.s32.totalorder 2, %s33
      // Predicated region
      $region33: #{tpu_custom_call.1} parent=5 // pred_check
        %p471 = pneg %p470
      $region34: #{tpu_custom_call.1} parent=5 // pred_check_branch
        %473 = sbr.rel (%p471) target = $region36
      $region35: #{tpu_custom_call.1} parent=5 // pred_region
        %s474 = ssub.s32 %s33, 2
        // Predicated region
        $region37: #{tpu_custom_call.1} parent=35 // pred_check
          %p475 = pneg %p132
        $region38: #{tpu_custom_call.1} parent=35 // pred_check_branch
          %477 = sbr.rel (%p475) target = $region40
        $region39: #{tpu_custom_call.1} parent=35 // pred_region
          %s478 = sand.u32 %s117, 1
          %s479 = scalar_lea.sflag [#allocation8], %s478
          %s480 = sand.u32 %s117, 1
          %s481 = smul.addr %s480, 8
          %s482 = scalar_lea.vmem [#allocation7], %s481
          %483 = dma.done %s479, 128
        $region40: #{tpu_custom_call.1} parent=35 // pred_fallthru
          _
      $region36: #{tpu_custom_call.1} parent=5 // pred_fallthru
        _
    $region6: #{tpu_custom_call.1} parent=1 // loop_footer
      %s37 = sadd.s32 1, %s33
    $region7: #{tpu_custom_call.1} parent=1 // loop_footer_branch
      %32 = sbr.rel target = $region3
    $region8: #{tpu_custom_call.1} parent=1 // loop_exit
      _
    %484 = vsyncpa [#allocation8], 1
    %s485 = scalar_lea.sflag [#allocation8], 1
    %486 = vsyncpa %s485, 1

</llo_original>
